<compile_context>
chip_gen: v7x
topology: tpu7x:2x2x1
jax: 0.10.0
libtpu: 0.0.40
codegen_flags: <defaults>
</compile_context>

<pallas_src>
import functools

import jax
import jax.numpy as jnp
from jax import lax
from jax.experimental import pallas as pl
from jax.experimental.pallas import tpu as pltpu

_LANE = 128
# Minimum sublane multiple per element size (f32 -> 8, bf16 -> 16, int8 -> 32).
_SUBLANE = {8: 8, 4: 8, 2: 16, 1: 32}


def _cdiv(a, b):
    return -(-a // b)


def _round_up(x, m):
    return _cdiv(x, m) * m


def _chip_config():
    """Returns (max_tile_rows, num_cores_hint) for the current TPU generation."""
    try:
        dev = jax.devices()[0]
        kind = dev.device_kind.lower()
    except Exception:
        return 4096, 1
    if "v7" in kind:
        # v7x: 2 TensorCores / chip -> shard the leading grid axis across them.
        n = getattr(dev, "num_cores", 2) or 2
        return 8192, (2 if n >= 2 else 1)        # 4 MiB/input tiles
    if "v6" in kind:
        return 8192, 1                           # fits 32 MiB default scoped VMEM
    # v5e / older / unknown: stay under the 16 MiB default scoped VMEM.
    return 4096, 1


def _make_cmse_kernel(tile_rows, steps, rows, mask_from, need_mask):
    """sum((x - y)^2) into one SMEM scalar per core.

    Steady state per (tile_rows, 128) block: two input vld streams, VPU
    sub/mul, then a pure-VPU fold into an (8, 128) vreg accumulator.  The
    single cross-lane (XLU) reduce is paid once per core at the last step.
    """

    def kernel(x_ref, y_ref, o_ref, acc_ref):
        c = pl.program_id(0)          # core axis (size 1 except on v7x)
        i = pl.program_id(1)          # reduction axis

        @pl.when(i == 0)
        def _init():
            acc_ref[...] = jnp.zeros_like(acc_ref)

        blk = c * steps + i           # unclamped block index

        def accumulate(apply_row_mask):
            d = x_ref[...].astype(jnp.float32) - y_ref[...].astype(jnp.float32)
            sq = d * d
            if apply_row_mask:
                row = blk * tile_rows + lax.broadcasted_iota(jnp.int32, sq.shape, 0)
                sq = jnp.where(row < rows, sq, 0.0)
            # Fold tile_rows//8 vregs into one: pure VPU adds, no XLU.
            acc_ref[...] += sq.reshape(-1, 8, _LANE).sum(axis=0)

        if need_mask:
            # Keep iota/compare/select off the steady-state path: only the
            # final partial block (and clamped duplicate blocks) are masked.
            @pl.when(blk < mask_from)
            def _full():
                accumulate(False)

            @pl.when(blk >= mask_from)
            def _tail():
                accumulate(True)
        else:
            accumulate(False)

        @pl.when(i == steps - 1)
        def _finalize():
            o_ref[0, 0] = jnp.sum(acc_ref[...])

    return kernel


@functools.partial(
    jax.jit, static_argnames=("scale", "num_cores", "max_tile_rows")
)
def _cmse_impl(inp, tgt, *, scale, num_cores, max_tile_rows):
    numel = inp.size
    x = inp.reshape(-1)
    y = tgt.reshape(-1)
    rows = numel // _LANE
    rem = numel - rows * _LANE

    tail = None
    if rem:
        # Rare ragged case: reduce the <128-element lane tail in plain JAX.
        dt = x[rows * _LANE:].astype(jnp.float32) - y[rows * _LANE:].astype(jnp.float32)
        tail = jnp.sum(dt * dt)
        if rows == 0:
            return (tail * scale).astype(jnp.float32)
        # TODO(synk): this prefix slice materializes one copy of the main body
        # (ragged numel only); a 1-D-block kernel could avoid it entirely.
        x = x[: rows * _LANE]
        y = y[: rows * _LANE]

    x = x.reshape(rows, _LANE)
    y = y.reshape(rows, _LANE)

    sub = _SUBLANE.get(jnp.dtype(x.dtype).itemsize, 8)
    tile_rows = min(max_tile_rows, _round_up(rows, sub))
    num_blocks = _cdiv(rows, tile_rows)
    cores = min(num_cores, num_blocks)
    steps = _cdiv(num_blocks, cores)
    # First block index whose rows must be masked (partial last block and/or
    # clamped duplicate blocks on the last core).
    mask_from = num_blocks if rows % tile_rows == 0 else num_blocks - 1
    need_mask = cores * steps > mask_from

    def in_map(c, i):
        # Clamp so any overflow step on the last core re-reads a valid block;
        # its contribution is fully masked out in-kernel.
        return (jnp.minimum(c * steps + i, num_blocks - 1), 0)

    if cores > 1:
        dim_sems = (pltpu.CORE_PARALLEL, pltpu.ARBITRARY)
    else:
        dim_sems = ("arbitrary", "arbitrary")

    partials = pl.pallas_call(
        _make_cmse_kernel(tile_rows, steps, rows, mask_from, need_mask),
        out_shape=jax.ShapeDtypeStruct((cores, 1), jnp.float32),
        grid_spec=pltpu.PrefetchScalarGridSpec(
            num_scalar_prefetch=0,
            grid=(cores, steps),
            in_specs=[
                pl.BlockSpec((tile_rows, _LANE), in_map),
                pl.BlockSpec((tile_rows, _LANE), in_map),
            ],
            out_specs=pl.BlockSpec(
                (1, 1), lambda c, i: (c, 0), memory_space=pltpu.SMEM
            ),
            scratch_shapes=[pltpu.VMEM((8, _LANE), jnp.float32)],
        ),
        compiler_params=pltpu.CompilerParams(dimension_semantics=dim_sems),
    )(x, y)

    total = jnp.sum(partials)
    if tail is not None:
        total = total + tail
    return (total * scale).astype(jnp.float32)


_SINGLE_CORE_FALLBACK = False


def cmse_loss(inp, tgt, *, cin, cout):
    """factor * mean((inp - tgt)^2) with factor = 1/(cin*cout)."""
    global _SINGLE_CORE_FALLBACK
    assert inp.shape == tgt.shape, "input/target shape mismatch"
    # Fold the 1/(cin*cout) factor and the 1/numel of the mean into one scale,
    # computed in double precision on the host.
    scale = 1.0 / (float(cin) * float(cout) * float(inp.size))
    max_tile, cores = _chip_config()
    if _SINGLE_CORE_FALLBACK:
        cores = 1
    try:
        return _cmse_impl(inp, tgt, scale=scale, num_cores=cores,
                          max_tile_rows=max_tile)
    except Exception:
        if cores == 1:
            raise
        # 2-core (v7x) build failed for some reason: fall back to the proven
        # single-core grid and remember the choice.
        _SINGLE_CORE_FALLBACK = True
        return _cmse_impl(inp, tgt, scale=scale, num_cores=1,
                          max_tile_rows=max_tile)


if __name__ == "__main__":
    key = jax.random.PRNGKey(0)
    k1, k2, k3, k4, k5, k6 = jax.random.split(key, 6)

    # Small NCHW conv-style shapes (module __init__(cin, cout)).
    B, C, H, W = 2, 4, 16, 16
    cin, cout = 4, 4

    inp = jax.random.normal(k1, (B, C, H, W), dtype=jnp.float32)
    tgt = jax.random.normal(k2, (B, C, H, W), dtype=jnp.float32)

    loss = cmse_loss(inp, tgt, cin=cin, cout=cout)
    jax.block_until_ready(loss)
    ref = (1.0 / (cin * cout)) * jnp.mean((inp - tgt) ** 2)
    assert jnp.allclose(loss, ref, rtol=1e-5, atol=1e-6), (loss, ref)

    # Medium case: multiple grid steps + partial (masked) last block.
    inp3 = jax.random.normal(k5, (2, 8, 330, 128), dtype=jnp.float32)
    tgt3 = jax.random.normal(k6, (2, 8, 330, 128), dtype=jnp.float32)
    loss3 = cmse_loss(inp3, tgt3, cin=8, cout=8)
    jax.block_until_ready(loss3)
    ref3 = (1.0 / (8 * 8)) * jnp.mean((inp3 - tgt3) ** 2)
    assert jnp.allclose(loss3, ref3, rtol=1e-4, atol=1e-6), (loss3, ref3)

    # Ragged case: numel % 128 != 0 (exercises JAX lane tail + row masking).
    inp2 = jax.random.normal(k3, (2, 3, 5, 7), dtype=jnp.float32)
    tgt2 = jax.random.normal(k4, (2, 3, 5, 7), dtype=jnp.float32)
    loss2 = cmse_loss(inp2, tgt2, cin=3, cout=3)
    jax.block_until_ready(loss2)
    ref2 = (1.0 / (3 * 3)) * jnp.mean((inp2 - tgt2) ** 2)
    assert jnp.allclose(loss2, ref2, rtol=1e-5, atol=1e-6), (loss2, ref2)

    print("KERNEL_OK")
</pallas_src>

<mosaic_0001>
module attributes {stable_mosaic.version = 11 : i64} {
  func.func @kernel(%arg0: i32, %arg1: i32, %arg2: memref<16x128xf32, #tpu.memory_space<vmem>>, %arg3: memref<16x128xf32, #tpu.memory_space<vmem>>, %arg4: memref<1x1xf32, #tpu.memory_space<smem>>, %arg5: memref<8x128xf32, #tpu.memory_space<vmem>>) attributes {dimension_semantics = [#tpu.dimension_semantics<arbitrary>, #tpu.dimension_semantics<arbitrary>], iteration_bounds = array<i64: 1, 1>, scalar_prefetch = 0 : i64, scratch_operands = 1 : i64, tpu.core_type = #tpu.core_type<tc>, window_params = [{transform_indices = @transform_0, window_bounds = array<i64: 16, 128>}, {transform_indices = @transform_1, window_bounds = array<i64: 16, 128>}, {transform_indices = @transform_2, window_bounds = array<i64: 1, 1>}]} {
    %c0_i32 = arith.constant 0 : i32
    %0 = arith.cmpi eq, %arg1, %c0_i32 : i32
    %1 = arith.extui %0 : i1 to i32
    %c0_i32_0 = arith.constant 0 : i32
    %2 = arith.cmpi ne, %1, %c0_i32_0 : i32
    scf.if %2 {
      %cst_10 = arith.constant 0.000000e+00 : f32
      %15 = vector.broadcast %cst_10 : f32 to vector<8x128xf32>
      %c0_11 = arith.constant 0 : index
      %c0_12 = arith.constant 0 : index
      %16 = vector.load %arg5[%c0_11, %c0_12] : memref<8x128xf32, #tpu.memory_space<vmem>>, vector<8x128xf32>
      tpu.vector_store %arg5[%c0_11, %c0_12], %15 {strides = array<i32>} : memref<8x128xf32, #tpu.memory_space<vmem>>, vector<8x128xf32>,
    } else {
    }
    %c0 = arith.constant 0 : index
    %c0_1 = arith.constant 0 : index
    %3 = vector.load %arg2[%c0, %c0_1] : memref<16x128xf32, #tpu.memory_space<vmem>>, vector<16x128xf32>
    %c0_2 = arith.constant 0 : index
    %c0_3 = arith.constant 0 : index
    %4 = vector.load %arg3[%c0_2, %c0_3] : memref<16x128xf32, #tpu.memory_space<vmem>>, vector<16x128xf32>
    %5 = arith.subf %3, %4 : vector<16x128xf32>
    %6 = arith.mulf %5, %5 : vector<16x128xf32>
    %c0_4 = arith.constant 0 : index
    %c0_5 = arith.constant 0 : index
    %7 = vector.load %arg5[%c0_4, %c0_5] : memref<8x128xf32, #tpu.memory_space<vmem>>, vector<8x128xf32>
    %8 = vector.shape_cast %6 : vector<16x128xf32> to vector<2x8x128xf32>
    %cst = arith.constant dense<0.000000e+00> : vector<8x128xf32>
    %9 = vector.multi_reduction <add>, %8, %cst [0] : vector<2x8x128xf32> to vector<8x128xf32>
    %10 = arith.addf %7, %9 : vector<8x128xf32>
    %c0_6 = arith.constant 0 : index
    %c0_7 = arith.constant 0 : index
    %11 = vector.load %arg5[%c0_6, %c0_7] : memref<8x128xf32, #tpu.memory_space<vmem>>, vector<8x128xf32>
    tpu.vector_store %arg5[%c0_6, %c0_7], %10 {strides = array<i32>} : memref<8x128xf32, #tpu.memory_space<vmem>>, vector<8x128xf32>,
    %c0_i32_8 = arith.constant 0 : i32
    %12 = arith.cmpi eq, %arg1, %c0_i32_8 : i32
    %13 = arith.extui %12 : i1 to i32
    %c0_i32_9 = arith.constant 0 : i32
    %14 = arith.cmpi ne, %13, %c0_i32_9 : i32
    scf.if %14 {
      %c0_10 = arith.constant 0 : index
      %c0_11 = arith.constant 0 : index
      %15 = vector.load %arg5[%c0_10, %c0_11] : memref<8x128xf32, #tpu.memory_space<vmem>>, vector<8x128xf32>
      %16 = vector.shape_cast %15 : vector<8x128xf32> to vector<1x8x128xf32>
      %cst_12 = arith.constant dense<0.000000e+00> : vector<1xf32>
      %17 = vector.multi_reduction <add>, %16, %cst_12 [1, 2] : vector<1x8x128xf32> to vector<1xf32>
      %18 = vector.shape_cast %17 : vector<1xf32> to vector<1x1x1xf32>
      %19 = vector.extract %18[0, 0, 0] : f32 from vector<1x1x1xf32>
      %c0_13 = arith.constant 0 : index
      %c0_14 = arith.constant 0 : index
      %20 = memref.load %arg4[%c0_13, %c0_14] : memref<1x1xf32, #tpu.memory_space<smem>>
      memref.store %19, %arg4[%c0_13, %c0_14] : memref<1x1xf32, #tpu.memory_space<smem>>
    } else {
    }
    return
  }
  func.func @transform_0(%arg0: i32, %arg1: i32) -> (i32, i32) {
    %c1_i32 = arith.constant 1 : i32
    %0 = arith.muli %arg0, %c1_i32 : i32
    %1 = arith.addi %0, %arg1 : i32
    %c0_i32 = arith.constant 0 : i32
    %2 = arith.minsi %1, %c0_i32 : i32
    %c0_i32_0 = arith.constant 0 : i32
    %c0_i32_1 = arith.constant 0 : i32
    return %2, %c0_i32_0 : i32, i32
  }
  func.func @transform_1(%arg0: i32, %arg1: i32) -> (i32, i32) {
    %c1_i32 = arith.constant 1 : i32
    %0 = arith.muli %arg0, %c1_i32 : i32
    %1 = arith.addi %0, %arg1 : i32
    %c0_i32 = arith.constant 0 : i32
    %2 = arith.minsi %1, %c0_i32 : i32
    %c0_i32_0 = arith.constant 0 : i32
    %c0_i32_1 = arith.constant 0 : i32
    return %2, %c0_i32_0 : i32, i32
  }
  func.func @transform_2(%arg0: i32, %arg1: i32) -> (i32, i32) {
    %c0_i32 = arith.constant 0 : i32
    %c0_i32_0 = arith.constant 0 : i32
    return %arg0, %c0_i32 : i32, i32
  }
}

</mosaic_0001>

<llo_original>
// kernel: _cmse_impl.1
$region0: #{_cmse_impl.1}
  #allocation0 [shape = 'u32[]', space=smem, size = 0x4, offset = 0x4, fixed_abs, tag = 'smem constant byte address 0x4 - core index']
  #allocation1 [shape = 'u32[144,128]{1,0:T(1,128)}', space=vmem, size = 0x12000, scoped, tag = 'internal scratch']
  #allocation2 [shape = 'f32[8,128]{1,0:T(8,128)}', space=vmem, size = 0x1000, scoped, tag = 'scratch operand']
  %s0 = inlined_call_operand.vmem [shape: f32[16,128], index: 0, kind: input, shape index: {}]
  %s1 = inlined_call_operand.vmem [shape: f32[16,128], index: 1, kind: input, shape index: {}]
  %s2 = inlined_call_operand.hbm [shape: f32[1,1], index: 2, kind: output, shape index: {}]
  %s3 = sld [smem:[#allocation0]]
  $region26: #{_cmse_impl.1} parent=0
    _
  %s5 = ssub.s32 1, %s3
  %s6 = scalar_select 0, %s5, %s3
  $region1: #{_cmse_impl.1} parent=0
    #allocation3 [shape = 'u8[512]{0}', space=smem, size = 0x200, scoped, tag = 'output window, operand 0, single buffered']
    #allocation4 [shape = 's32[1]{0}', space=sflag, size = 0x4, scoped, tag = 'scoped memory for _cmse_impl.1']
    %7 = vsyncpa [#allocation4], 0
    // Predicated region
    $region2: #{_cmse_impl.1} parent=1 // pred_check
      _
    $region3: #{_cmse_impl.1} parent=1 // pred_check_branch
      %9 = sbr.rel (0) target = $region5
    $region4: #{_cmse_impl.1} parent=1 // pred_region
      %s10 = sadd.s32 0, 0
      %p11 = scmp.lt.s32.totalorder %s10, 0
      %s12 = scalar_select %p11, %s10, 0
      %s13 = smul.u32 2, %s12
      %p14 = scmp.lt.s32.totalorder %s13, 1
      %s15 = scalar_select %p14, %s13, 1
      %s16 = smul.addr %s15, 8
      %s17 = scalar_lea.vmem %s0, %s16
      %s18 = sadd.s32 0, 0
      %p19 = scmp.lt.s32.totalorder %s18, 0
      %s20 = scalar_select %p19, %s18, 0
      %s21 = smul.u32 2, %s20
    $region5: #{_cmse_impl.1} parent=1 // pred_fallthru
      _
    // Predicated region
    $region6: #{_cmse_impl.1} parent=1 // pred_check
      _
    $region7: #{_cmse_impl.1} parent=1 // pred_check_branch
      %23 = sbr.rel (0) target = $region9
    $region8: #{_cmse_impl.1} parent=1 // pred_region
      %s24 = sadd.s32 0, 0
      %p25 = scmp.lt.s32.totalorder %s24, 0
      %s26 = scalar_select %p25, %s24, 0
      %s27 = smul.u32 2, %s26
      %p28 = scmp.lt.s32.totalorder %s27, 1
      %s29 = scalar_select %p28, %s27, 1
      %s30 = smul.addr %s29, 8
      %s31 = scalar_lea.vmem %s1, %s30
      %s32 = sadd.s32 0, 0
      %p33 = scmp.lt.s32.totalorder %s32, 0
      %s34 = scalar_select %p33, %s32, 0
      %s35 = smul.u32 2, %s34
    $region9: #{_cmse_impl.1} parent=1 // pred_fallthru
      _
    %s36 = sadd.s32 0, 0
    %p37 = scmp.lt.s32.totalorder %s36, 0
    %s38 = scalar_select %p37, %s36, 0
    %s39 = smul.u32 2, %s38
    %p40 = scmp.lt.s32.totalorder %s39, 1
    %s41 = scalar_select %p40, %s39, 1
    %s42 = smul.addr %s41, 8
    %s43 = scalar_lea.vmem %s0, %s42
    %s44 = sadd.s32 0, 0
    %p45 = scmp.lt.s32.totalorder %s44, 0
    %s46 = scalar_select %p45, %s44, 0
    %s47 = smul.u32 2, %s46
    %p48 = scmp.lt.s32.totalorder %s47, 1
    %s49 = scalar_select %p48, %s47, 1
    %s50 = smul.addr %s49, 8
    %s51 = scalar_lea.vmem %s1, %s50
    %s52 = sadd.s32 0, 0
    %p53 = scmp.lt.s32.totalorder %s52, 0
    %s54 = scalar_select %p53, %s52, 0
    %s55 = smul.u32 2, %s54
    %p56 = scmp.lt.s32.totalorder %s55, 1
    %s57 = scalar_select %p56, %s55, 1
    %s58 = smul.addr %s57, 8
    %s59 = scalar_lea.vmem %s0, %s58
    %s60 = sadd.s32 0, 0
    %p61 = scmp.lt.s32.totalorder %s60, 0
    %s62 = scalar_select %p61, %s60, 0
    %s63 = smul.u32 2, %s62
    %s64 = sadd.s32 0, 0
    %p65 = scmp.lt.s32.totalorder %s64, 0
    %s66 = scalar_select %p65, %s64, 0
    %s67 = smul.u32 2, %s66
    %p68 = scmp.lt.s32.totalorder %s67, 1
    %s69 = scalar_select %p68, %s67, 1
    %s70 = smul.addr %s69, 8
    %s71 = scalar_lea.vmem %s1, %s70
    %s72 = sadd.s32 0, 0
    %p73 = scmp.lt.s32.totalorder %s72, 0
    %s74 = scalar_select %p73, %s72, 0
    %s75 = smul.u32 2, %s74
    %p76 = scmp.eq.s32.totalorder 0, 0
    // Predicated region
    $region10: #{_cmse_impl.1} parent=1 // pred_check
      %p77 = pneg %p76
    $region11: #{_cmse_impl.1} parent=1 // pred_check_branch
      %79 = sbr.rel (%p77) target = $region13
    $region12: #{_cmse_impl.1} parent=1 // pred_region
      %80 = vst [vmem:[#allocation2] sm:$0xff] 0.0
    $region13: #{_cmse_impl.1} parent=1 // pred_fallthru
      _
    %v81 = vld [vmem:[%s59] sm:$0xff]
    %v82 = vld [vmem:[%s59 + $0x8] sm:$0xff]
    %v83 = vld [vmem:[%s71] sm:$0xff]
    %v84 = vld [vmem:[%s71 + $0x8] sm:$0xff]
    %v85 = vsub.f32 %v81, %v83
    %v86 = vsub.f32 %v82, %v84
    %v87 = vmul.f32 %v85, %v85
    %v88 = vmul.f32 %v86, %v86
    %v89 = vld [vmem:[#allocation2] sm:$0xff]
    %v90 = vadd.f32 %v87, %v88
    %v91 = vadd.f32 %v89, %v90
    %92 = vst [vmem:[#allocation2] sm:$0xff] %v91
    // Predicated region
    $region14: #{_cmse_impl.1} parent=1 // pred_check
      %p93 = pneg %p76
    $region15: #{_cmse_impl.1} parent=1 // pred_check_branch
      %95 = sbr.rel (%p93) target = $region17
    $region16: #{_cmse_impl.1} parent=1 // pred_region
      %v96 = vld [vmem:[#allocation2] sm:$0xff]
      %97 = vadd.xlane.f32.xlu0 %v96
      %v98 = vpop.xlane.xlu0 %97
      %v99 = vrot.slane %v98, 4
      %v100 = vadd.f32 %v98, %v99
      %v101 = vrot.slane %v100, 2
      %v102 = vadd.f32 %v100, %v101
      %v103 = vrot.slane %v102, 1
      %v104 = vadd.f32 %v102, %v103
      %s105 = vtos %v104
      %s106 = scalar_lea.smem [#allocation3], 0
      %107 = sst [smem:[%s106]] %s105
    $region17: #{_cmse_impl.1} parent=1 // pred_fallthru
      _
    // Predicated region
    $region18: #{_cmse_impl.1} parent=1 // pred_check
      _
    $region19: #{_cmse_impl.1} parent=1 // pred_check_branch
      %109 = sbr.rel (0) target = $region21
    $region20: #{_cmse_impl.1} parent=1 // pred_region
      %s111 = ssub.s32 16, 16
      %112 = vsyncadd [#allocation4], %s111
      %115 = dma.smem_to_hbm [#allocation3], 16, %s2, [#allocation4]
    $region21: #{_cmse_impl.1} parent=1 // pred_fallthru
      _
    // Predicated region
    $region22: #{_cmse_impl.1} parent=1 // pred_check
      _
    $region23: #{_cmse_impl.1} parent=1 // pred_check_branch
      %117 = sbr.rel (0) target = $region25
    $region24: #{_cmse_impl.1} parent=1 // pred_region
      %118 = dma.done [#allocation4], 16
    $region25: #{_cmse_impl.1} parent=1 // pred_fallthru
      _
    %119 = sfence
    %120 = vsyncpa [#allocation4], 1

</llo_original>
